<compile_context>
chip_gen: v7x
topology: tpu7x:2x2x1
jax: 0.10.0
libtpu: 0.0.40
codegen_flags: <defaults>
</compile_context>

<pallas_src>
import jax
import jax.numpy as jnp
from jax.experimental import pallas as pl
from jax.experimental.pallas import tpu as pltpu


def _general_dot_score_kernel(t_ref, w_ref, x_ref, o_ref):
    # t_ref: (B, S_tgt, D_tgt), w_ref: (D_in, D_tgt), x_ref: (B, S_in, D_in)
    B, S_tgt, D_tgt = t_ref.shape
    _, S_in, D_in = x_ref.shape

    # --- Projection, hoisted over the batch --------------------------------
    # One (B*S_tgt, D_tgt) @ (D_in, D_tgt)^T matmul expressed as dot_general
    # with contracting-last-dims on both operands (no explicit transpose).
    t2 = t_ref[...].reshape(B * S_tgt, D_tgt).astype(jnp.float32)
    w = w_ref[...].astype(jnp.float32)
    proj = jax.lax.dot_general(
        t2, w,
        dimension_numbers=(((1,), (1,)), ((), ())),
        preferred_element_type=jnp.float32,
    ).reshape(B, S_tgt, D_in)                      # (B, S_tgt, D_in)

    # --- Score: proj[b] @ inputs[b]^T --------------------------------------
    # Batched dot_general, again contracting on the last (feature) axis of
    # both operands so no transpose/relayout is needed.
    x = x_ref[...].astype(jnp.float32)
    score = jax.lax.dot_general(
        proj, x,
        dimension_numbers=(((2,), (2,)), ((0,), (0,))),
        preferred_element_type=jnp.float32,
    )                                              # (B, S_tgt, S_in)

    o_ref[...] = score.astype(o_ref.dtype)


def general_dot_product_score(inputs, targets, weight):
    """inputs: (B, S_in, D_in), targets: (B, S_tgt, D_tgt), weight: (D_in, D_tgt)."""
    B, S_in, D_in = inputs.shape
    B2, S_tgt, D_tgt = targets.shape
    assert B == B2
    assert weight.shape == (D_in, D_tgt)

    out_dtype = jnp.promote_types(
        jnp.promote_types(targets.dtype, weight.dtype), inputs.dtype
    )

    # Single invocation: whole (tiny) operands resident in VMEM, no grid.
    return pl.pallas_call(
        _general_dot_score_kernel,
        out_shape=jax.ShapeDtypeStruct((B, S_tgt, S_in), out_dtype),
        in_specs=[
            pl.BlockSpec(memory_space=pltpu.MemorySpace.VMEM),  # targets
            pl.BlockSpec(memory_space=pltpu.MemorySpace.VMEM),  # weight
            pl.BlockSpec(memory_space=pltpu.MemorySpace.VMEM),  # inputs
        ],
        out_specs=pl.BlockSpec(memory_space=pltpu.MemorySpace.VMEM),
    )(targets, weight, inputs)


if __name__ == "__main__":
    key = jax.random.PRNGKey(0)
    k_in, k_tgt, k_w = jax.random.split(key, 3)

    B = 2
    S_in = 16        # inputs sequence length
    S_tgt = 8        # targets sequence length
    input_size = 32
    target_size = 32

    inputs = jax.random.normal(k_in, (B, S_in, input_size), dtype=jnp.float32)
    targets = jax.random.normal(k_tgt, (B, S_tgt, target_size), dtype=jnp.float32)
    # Deterministic Linear weight (shape = (out_features, in_features) = (input_size, target_size))
    bound = 1.0 / (target_size ** 0.5)
    weight = jax.random.uniform(
        k_w, (input_size, target_size), dtype=jnp.float32, minval=-bound, maxval=bound
    )

    score = general_dot_product_score(inputs, targets, weight)
    score = jax.block_until_ready(score)

    # Pure-JAX reference for correctness.
    proj_ref = jnp.einsum("btd,id->bti", targets, weight)
    score_ref = jnp.einsum("bti,bsi->bts", proj_ref, inputs)
    assert score.shape == (B, S_tgt, S_in)
    assert jnp.allclose(score, score_ref, atol=1e-4, rtol=1e-4)

    print("KERNEL_OK")
</pallas_src>

<mosaic_0001>
module attributes {stable_mosaic.version = 11 : i64} {
  func.func @_general_dot_score_kernel(%arg0: memref<2x8x32xf32, #tpu.memory_space<vmem>>, %arg1: memref<32x32xf32, #tpu.memory_space<vmem>>, %arg2: memref<2x16x32xf32, #tpu.memory_space<vmem>>, %arg3: memref<2x8x16xf32, #tpu.memory_space<vmem>>) attributes {dimension_semantics = [], scalar_prefetch = 0 : i64, scratch_operands = 0 : i64, tpu.core_type = #tpu.core_type<tc>} {
    %c0 = arith.constant 0 : index
    %c0_0 = arith.constant 0 : index
    %c0_1 = arith.constant 0 : index
    %0 = vector.load %arg0[%c0, %c0_0, %c0_1] : memref<2x8x32xf32, #tpu.memory_space<vmem>>, vector<2x8x32xf32>
    %1 = vector.shape_cast %0 : vector<2x8x32xf32> to vector<16x32xf32>
    %c0_2 = arith.constant 0 : index
    %c0_3 = arith.constant 0 : index
    %2 = vector.load %arg1[%c0_2, %c0_3] : memref<32x32xf32, #tpu.memory_space<vmem>>, vector<32x32xf32>
    %cst = arith.constant dense<0.000000e+00> : vector<16x32xf32>
    %3 = tpu.matmul %1, %2, %cst {dimension_numbers = #tpu.dot_dimension_numbers<[1], [1], [0], [0], [0, 0, 1, 0], [], []>} : vector<16x32xf32>, vector<32x32xf32>, vector<16x32xf32> -> vector<16x32xf32>
    %4 = vector.shape_cast %3 : vector<16x32xf32> to vector<2x8x32xf32>
    %c0_4 = arith.constant 0 : index
    %c0_5 = arith.constant 0 : index
    %c0_6 = arith.constant 0 : index
    %5 = vector.load %arg2[%c0_4, %c0_5, %c0_6] : memref<2x16x32xf32, #tpu.memory_space<vmem>>, vector<2x16x32xf32>
    %cst_7 = arith.constant dense<0.000000e+00> : vector<2x8x16xf32>
    %6 = tpu.matmul %4, %5, %cst_7 {dimension_numbers = #tpu.dot_dimension_numbers<[2], [2], [1], [1], [0, 0, 0, 1, 1, 1], [0], [0]>} : vector<2x8x32xf32>, vector<2x16x32xf32>, vector<2x8x16xf32> -> vector<2x8x16xf32>
    %c0_8 = arith.constant 0 : index
    %c0_9 = arith.constant 0 : index
    %c0_10 = arith.constant 0 : index
    %7 = vector.load %arg3[%c0_8, %c0_9, %c0_10] : memref<2x8x16xf32, #tpu.memory_space<vmem>>, vector<2x8x16xf32>
    tpu.vector_store %arg3[%c0_8, %c0_9, %c0_10], %6 {strides = array<i32>} : memref<2x8x16xf32, #tpu.memory_space<vmem>>, vector<2x8x16xf32>,
    return
  }
}

</mosaic_0001>

<llo_original>
// kernel: tpu_custom_call.1
$region0: #{tpu_custom_call.1}
  #allocation0 [shape = 'u32[]', space=smem, size = 0x4, offset = 0x4, fixed_abs, tag = 'smem constant byte address 0x4 - core index']
  #allocation1 [shape = 'u32[144,128]{1,0:T(1,128)}', space=vmem, size = 0x12000, scoped, tag = 'internal scratch']
  %s0 = inlined_call_operand.hbm [shape: f32[2,8,32], index: 0, kind: input, shape index: {}]
  %s1 = inlined_call_operand.hbm [shape: f32[32,32], index: 1, kind: input, shape index: {}]
  %s2 = inlined_call_operand.hbm [shape: f32[2,16,32], index: 2, kind: input, shape index: {}]
  %s3 = inlined_call_operand.hbm [shape: f32[2,8,16], index: 3, kind: output, shape index: {}]
  %s4 = sld [smem:[#allocation0]]
  $region34: #{tpu_custom_call.1} parent=0
    _
  %s6 = ssub.s32 1, %s4
  %s7 = scalar_select 0, %s6, %s4
  $region1: #{tpu_custom_call.1} parent=0
    #allocation2 [shape = 'u8[8192]{0}', space=vmem, size = 0x2000, scoped, tag = 'input window, operand 0, single buffered']
    #allocation3 [shape = 's32[1]{0}', space=sflag, size = 0x4, scoped, tag = 'scoped memory for tpu_custom_call.1']
    #allocation4 [shape = 's32[1]{0}', space=sflag, size = 0x4, scoped, tag = 'scoped memory for tpu_custom_call.1']
    #allocation5 [shape = 'u8[16384]{0}', space=vmem, size = 0x4000, scoped, tag = 'input window, operand 1, single buffered']
    #allocation6 [shape = 's32[1]{0}', space=sflag, size = 0x4, scoped, tag = 'scoped memory for tpu_custom_call.1']
    #allocation7 [shape = 'u8[16384]{0}', space=vmem, size = 0x4000, scoped, tag = 'input window, operand 2, single buffered']
    #allocation8 [shape = 'u8[8192]{0}', space=vmem, size = 0x2000, scoped, tag = 'output window, operand 0, single buffered']
    %8 = vsyncpa [#allocation3], 0
    %9 = vsyncpa [#allocation6], 0
    %10 = vsyncpa [#allocation4], 0
    // Predicated region
    $region2: #{tpu_custom_call.1} parent=1 // pred_check
      _
    $region3: #{tpu_custom_call.1} parent=1 // pred_check_branch
      %12 = sbr.rel (0) target = $region5
    $region4: #{tpu_custom_call.1} parent=1 // pred_region
      %s14 = ssub.s32 256, 256
      %15 = vsyncadd [#allocation3], %s14
      %s16 = sshll.u32 [#allocation2], 4
      %s17 = int_to_ptr.vmem [resolvable:$true] %s16
      %22 = dma.hbm_to_vmem [thread:$0]  %s0, 256, %s17, [#allocation3], 128, 128, 8
    $region5: #{tpu_custom_call.1} parent=1 // pred_fallthru
      _
    // Predicated region
    $region6: #{tpu_custom_call.1} parent=1 // pred_check
      _
    $region7: #{tpu_custom_call.1} parent=1 // pred_check_branch
      %24 = sbr.rel (0) target = $region9
    $region8: #{tpu_custom_call.1} parent=1 // pred_region
      %s26 = ssub.s32 512, 512
      %27 = vsyncadd [#allocation6], %s26
      %s28 = sshll.u32 [#allocation5], 4
      %s29 = int_to_ptr.vmem [resolvable:$true] %s28
      %34 = dma.hbm_to_vmem [thread:$0]  %s1, 512, %s29, [#allocation6], 128, 128, 8
    $region9: #{tpu_custom_call.1} parent=1 // pred_fallthru
      _
    // Predicated region
    $region10: #{tpu_custom_call.1} parent=1 // pred_check
      _
    $region11: #{tpu_custom_call.1} parent=1 // pred_check_branch
      %36 = sbr.rel (0) target = $region13
    $region12: #{tpu_custom_call.1} parent=1 // pred_region
      %s38 = ssub.s32 512, 512
      %39 = vsyncadd [#allocation6], %s38
      %s40 = sshll.u32 [#allocation7], 4
      %s41 = int_to_ptr.vmem [resolvable:$true] %s40
      %46 = dma.hbm_to_vmem [thread:$0]  %s2, 512, %s41, [#allocation6], 128, 128, 8
    $region13: #{tpu_custom_call.1} parent=1 // pred_fallthru
      _
    // Predicated region
    $region14: #{tpu_custom_call.1} parent=1 // pred_check
      _
    $region15: #{tpu_custom_call.1} parent=1 // pred_check_branch
      %48 = sbr.rel (0) target = $region17
    $region16: #{tpu_custom_call.1} parent=1 // pred_region
      %49 = dma.done [#allocation3], 256
    $region17: #{tpu_custom_call.1} parent=1 // pred_fallthru
      _
    // Predicated region
    $region18: #{tpu_custom_call.1} parent=1 // pred_check
      _
    $region19: #{tpu_custom_call.1} parent=1 // pred_check_branch
      %51 = sbr.rel (0) target = $region21
    $region20: #{tpu_custom_call.1} parent=1 // pred_region
      %52 = dma.done [#allocation6], 512
    $region21: #{tpu_custom_call.1} parent=1 // pred_fallthru
      _
    // Predicated region
    $region22: #{tpu_custom_call.1} parent=1 // pred_check
      _
    $region23: #{tpu_custom_call.1} parent=1 // pred_check_branch
      %54 = sbr.rel (0) target = $region25
    $region24: #{tpu_custom_call.1} parent=1 // pred_region
      %55 = dma.done [#allocation6], 512
    $region25: #{tpu_custom_call.1} parent=1 // pred_fallthru
      _
    %v56 = vld [vmem:[#allocation2] sm:$0xff]
    %v57 = vld [vmem:[#allocation2 + $0x8] sm:$0xff]
    %v58 = vld [vmem:[#allocation5] sm:$0xff]
    %v59 = vld [vmem:[#allocation5 + $0x8] sm:$0xff]
    %v60 = vld [vmem:[#allocation5 + $0x10] sm:$0xff]
    %v61 = vld [vmem:[#allocation5 + $0x18] sm:$0xff]
    %vm62 = vcmask 261120
    %v64 = vsel %vm62, %v56, 0
    %v67 = vsel %vm62, %v57, 0
    %v70 = vsel %vm62, %v58, 0
    %v73 = vsel %vm62, %v59, 0
    %v76 = vsel %vm62, %v60, 0
    %v79 = vsel %vm62, %v61, 0
    %81 = vmatprep.subr.mxu0 0.0
    %82 = vmatpush1.xpose.msra.mxu0 %v70
    %83 = vmatprep.subr.mxu0 0.0
    %84 = vmatpush1.xpose.msra.mxu0 %v73
    %85 = vmatprep.subr.mxu0 0.0
    %86 = vmatpush1.xpose.msra.mxu0 %v76
    %87 = vmatprep.subr.mxu0 0.0
    %88 = vmatpush1.xpose.msra.mxu0 %v79
    %89 = vmatprep.subr.mxu0 0.0
    %90 = vmatpush1.xpose.msra.mxu0 0.0
    %91 = vmatprep.subr.mxu0 0.0
    %92 = vmatpush1.xpose.msra.mxu0 0.0
    %93 = vmatprep.subr.mxu0 0.0
    %94 = vmatpush1.xpose.msra.mxu0 0.0
    %95 = vmatprep.subr.mxu0 0.0
    %96 = vmatpush1.xpose.msra.mxu0 0.0
    %97 = vmatprep.subr.mxu0 0.0
    %98 = vmatpush1.xpose.msra.mxu0 0.0
    %99 = vmatprep.subr.mxu0 0.0
    %100 = vmatpush1.xpose.msra.mxu0 0.0
    %101 = vmatprep.subr.mxu0 0.0
    %102 = vmatpush1.xpose.msra.mxu0 0.0
    %103 = vmatprep.subr.mxu0 0.0
    %104 = vmatpush1.xpose.msra.mxu0 0.0
    %105 = vmatprep.subr.mxu0 0.0
    %106 = vmatpush1.xpose.msra.mxu0 0.0
    %107 = vmatprep.subr.mxu0 0.0
    %108 = vmatpush1.xpose.msra.mxu0 0.0
    %109 = vmatprep.subr.mxu0 0.0
    %110 = vmatpush1.xpose.msra.mxu0 0.0
    %111 = vmatprep.subr.mxu0 0.0
    %112 = vmatpush1.xpose.msra.mxu0 0.0
    %113 = vmatprep.subr.mxu0 0.0
    %114 = vmatpush1.xpose.msra.mxu0 0.0
    %115 = vmatprep.subr.mxu0 0.0
    %116 = vmatpush1.xpose.msra.mxu0 0.0
    %117 = vmatprep.subr.mxu0 0.0
    %118 = vmatpush1.xpose.msra.mxu0 0.0
    %119 = vmatprep.subr.mxu0 0.0
    %120 = vmatpush1.xpose.msra.mxu0 0.0
    %121 = vmatprep.subr.mxu0 0.0
    %122 = vmatpush1.xpose.msra.mxu0 0.0
    %123 = vmatprep.subr.mxu0 0.0
    %124 = vmatpush1.xpose.msra.mxu0 0.0
    %125 = vmatprep.subr.mxu0 0.0
    %126 = vmatpush1.xpose.msra.mxu0 0.0
    %127 = vmatprep.subr.mxu0 0.0
    %128 = vmatpush1.xpose.msra.mxu0 0.0
    %129 = vmatprep.subr.mxu0 0.0
    %130 = vmatpush1.xpose.msra.mxu0 0.0
    %131 = vmatprep.subr.mxu0 0.0
    %132 = vmatpush1.xpose.msra.mxu0 0.0
    %133 = vmatprep.subr.mxu0 0.0
    %134 = vmatpush1.xpose.msra.mxu0 0.0
    %135 = vmatprep.subr.mxu0 0.0
    %136 = vmatpush1.xpose.msra.mxu0 0.0
    %137 = vmatprep.subr.mxu0 0.0
    %138 = vmatpush1.xpose.msra.mxu0 0.0
    %139 = vmatprep.subr.mxu0 0.0
    %140 = vmatpush1.xpose.msra.mxu0 0.0
    %141 = vmatprep.subr.mxu0 0.0
    %142 = vmatpush1.xpose.msra.mxu0 0.0
    %143 = vmatprep.subr.mxu0 0.0
    %144 = vmatpush1.xpose.msra.mxu0 0.0
    %145 = vmatprep.mubr.f32.mxu0 0.0
    %146 = vmatmul.mubr.f32.gmra.mrb[0].mxu0 %v64
    %v147 = vpop.f32.mrb[0].mxu0
    %v148 = vadd.f32 0.0, %v147
    %v149 = vpop.f32.mrb[0].mxu0
    %150 = vmatprep.mubr.f32.mxu0 0.0
    %151 = vmatmul.mubr.f32.gmra.mrb[0].mxu0 %v67
    %v152 = vpop.f32.mrb[0].mxu0
    %v153 = vadd.f32 0.0, %v152
    %v154 = vpop.f32.mrb[0].mxu0
    %155 = vdwg.mxu0
    %v156 = vld [vmem:[#allocation7] sm:$0xff]
    %v157 = vld [vmem:[#allocation7 + $0x8] sm:$0xff]
    %v158 = vld [vmem:[#allocation7 + $0x10] sm:$0xff]
    %v159 = vld [vmem:[#allocation7 + $0x18] sm:$0xff]
    %v161 = vsel %vm62, %v148, 0
    %v164 = vsel %vm62, %v156, 0
    %v167 = vsel %vm62, %v157, 0
    %169 = vmatprep.subr.mxu0 0.0
    %170 = vmatpush1.xpose.msra.mxu0 %v164
    %171 = vmatprep.subr.mxu0 0.0
    %172 = vmatpush1.xpose.msra.mxu0 %v167
    %173 = vmatprep.subr.mxu0 0.0
    %174 = vmatpush1.xpose.msra.mxu0 0.0
    %175 = vmatprep.subr.mxu0 0.0
    %176 = vmatpush1.xpose.msra.mxu0 0.0
    %177 = vmatprep.subr.mxu0 0.0
    %178 = vmatpush1.xpose.msra.mxu0 0.0
    %179 = vmatprep.subr.mxu0 0.0
    %180 = vmatpush1.xpose.msra.mxu0 0.0
    %181 = vmatprep.subr.mxu0 0.0
    %182 = vmatpush1.xpose.msra.mxu0 0.0
    %183 = vmatprep.subr.mxu0 0.0
    %184 = vmatpush1.xpose.msra.mxu0 0.0
    %185 = vmatprep.subr.mxu0 0.0
    %186 = vmatpush1.xpose.msra.mxu0 0.0
    %187 = vmatprep.subr.mxu0 0.0
    %188 = vmatpush1.xpose.msra.mxu0 0.0
    %189 = vmatprep.subr.mxu0 0.0
    %190 = vmatpush1.xpose.msra.mxu0 0.0
    %191 = vmatprep.subr.mxu0 0.0
    %192 = vmatpush1.xpose.msra.mxu0 0.0
    %193 = vmatprep.subr.mxu0 0.0
    %194 = vmatpush1.xpose.msra.mxu0 0.0
    %195 = vmatprep.subr.mxu0 0.0
    %196 = vmatpush1.xpose.msra.mxu0 0.0
    %197 = vmatprep.subr.mxu0 0.0
    %198 = vmatpush1.xpose.msra.mxu0 0.0
    %199 = vmatprep.subr.mxu0 0.0
    %200 = vmatpush1.xpose.msra.mxu0 0.0
    %201 = vmatprep.subr.mxu0 0.0
    %202 = vmatpush1.xpose.msra.mxu0 0.0
    %203 = vmatprep.subr.mxu0 0.0
    %204 = vmatpush1.xpose.msra.mxu0 0.0
    %205 = vmatprep.subr.mxu0 0.0
    %206 = vmatpush1.xpose.msra.mxu0 0.0
    %207 = vmatprep.subr.mxu0 0.0
    %208 = vmatpush1.xpose.msra.mxu0 0.0
    %209 = vmatprep.subr.mxu0 0.0
    %210 = vmatpush1.xpose.msra.mxu0 0.0
    %211 = vmatprep.subr.mxu0 0.0
    %212 = vmatpush1.xpose.msra.mxu0 0.0
    %213 = vmatprep.subr.mxu0 0.0
    %214 = vmatpush1.xpose.msra.mxu0 0.0
    %215 = vmatprep.subr.mxu0 0.0
    %216 = vmatpush1.xpose.msra.mxu0 0.0
    %217 = vmatprep.subr.mxu0 0.0
    %218 = vmatpush1.xpose.msra.mxu0 0.0
    %219 = vmatprep.subr.mxu0 0.0
    %220 = vmatpush1.xpose.msra.mxu0 0.0
    %221 = vmatprep.subr.mxu0 0.0
    %222 = vmatpush1.xpose.msra.mxu0 0.0
    %223 = vmatprep.subr.mxu0 0.0
    %224 = vmatpush1.xpose.msra.mxu0 0.0
    %225 = vmatprep.subr.mxu0 0.0
    %226 = vmatpush1.xpose.msra.mxu0 0.0
    %227 = vmatprep.subr.mxu0 0.0
    %228 = vmatpush1.xpose.msra.mxu0 0.0
    %229 = vmatprep.subr.mxu0 0.0
    %230 = vmatpush1.xpose.msra.mxu0 0.0
    %231 = vmatprep.subr.mxu0 0.0
    %232 = vmatpush1.xpose.msra.mxu0 0.0
    %233 = vmatprep.mubr.f32.mxu0 0.0
    %234 = vmatmul.mubr.f32.gmra.mrb[0].mxu0 %v161
    %v235 = vpop.f32.mrb[0].mxu0
    %v236 = vadd.f32 0.0, %v235
    %v237 = vpop.f32.mrb[0].mxu0
    %238 = vdwg.mxu0
    %v240 = vsel %vm62, %v153, 0
    %v243 = vsel %vm62, %v158, 0
    %v246 = vsel %vm62, %v159, 0
    %248 = vmatprep.subr.mxu0 0.0
    %249 = vmatpush1.xpose.msra.mxu0 %v243
    %250 = vmatprep.subr.mxu0 0.0
    %251 = vmatpush1.xpose.msra.mxu0 %v246
    %252 = vmatprep.subr.mxu0 0.0
    %253 = vmatpush1.xpose.msra.mxu0 0.0
    %254 = vmatprep.subr.mxu0 0.0
    %255 = vmatpush1.xpose.msra.mxu0 0.0
    %256 = vmatprep.subr.mxu0 0.0
    %257 = vmatpush1.xpose.msra.mxu0 0.0
    %258 = vmatprep.subr.mxu0 0.0
    %259 = vmatpush1.xpose.msra.mxu0 0.0
    %260 = vmatprep.subr.mxu0 0.0
    %261 = vmatpush1.xpose.msra.mxu0 0.0
    %262 = vmatprep.subr.mxu0 0.0
    %263 = vmatpush1.xpose.msra.mxu0 0.0
    %264 = vmatprep.subr.mxu0 0.0
    %265 = vmatpush1.xpose.msra.mxu0 0.0
    %266 = vmatprep.subr.mxu0 0.0
    %267 = vmatpush1.xpose.msra.mxu0 0.0
    %268 = vmatprep.subr.mxu0 0.0
    %269 = vmatpush1.xpose.msra.mxu0 0.0
    %270 = vmatprep.subr.mxu0 0.0
    %271 = vmatpush1.xpose.msra.mxu0 0.0
    %272 = vmatprep.subr.mxu0 0.0
    %273 = vmatpush1.xpose.msra.mxu0 0.0
    %274 = vmatprep.subr.mxu0 0.0
    %275 = vmatpush1.xpose.msra.mxu0 0.0
    %276 = vmatprep.subr.mxu0 0.0
    %277 = vmatpush1.xpose.msra.mxu0 0.0
    %278 = vmatprep.subr.mxu0 0.0
    %279 = vmatpush1.xpose.msra.mxu0 0.0
    %280 = vmatprep.subr.mxu0 0.0
    %281 = vmatpush1.xpose.msra.mxu0 0.0
    %282 = vmatprep.subr.mxu0 0.0
    %283 = vmatpush1.xpose.msra.mxu0 0.0
    %284 = vmatprep.subr.mxu0 0.0
    %285 = vmatpush1.xpose.msra.mxu0 0.0
    %286 = vmatprep.subr.mxu0 0.0
    %287 = vmatpush1.xpose.msra.mxu0 0.0
    %288 = vmatprep.subr.mxu0 0.0
    %289 = vmatpush1.xpose.msra.mxu0 0.0
    %290 = vmatprep.subr.mxu0 0.0
    %291 = vmatpush1.xpose.msra.mxu0 0.0
    %292 = vmatprep.subr.mxu0 0.0
    %293 = vmatpush1.xpose.msra.mxu0 0.0
    %294 = vmatprep.subr.mxu0 0.0
    %295 = vmatpush1.xpose.msra.mxu0 0.0
    %296 = vmatprep.subr.mxu0 0.0
    %297 = vmatpush1.xpose.msra.mxu0 0.0
    %298 = vmatprep.subr.mxu0 0.0
    %299 = vmatpush1.xpose.msra.mxu0 0.0
    %300 = vmatprep.subr.mxu0 0.0
    %301 = vmatpush1.xpose.msra.mxu0 0.0
    %302 = vmatprep.subr.mxu0 0.0
    %303 = vmatpush1.xpose.msra.mxu0 0.0
    %304 = vmatprep.subr.mxu0 0.0
    %305 = vmatpush1.xpose.msra.mxu0 0.0
    %306 = vmatprep.subr.mxu0 0.0
    %307 = vmatpush1.xpose.msra.mxu0 0.0
    %308 = vmatprep.subr.mxu0 0.0
    %309 = vmatpush1.xpose.msra.mxu0 0.0
    %310 = vmatprep.subr.mxu0 0.0
    %311 = vmatpush1.xpose.msra.mxu0 0.0
    %312 = vmatprep.mubr.f32.mxu0 0.0
    %313 = vmatmul.mubr.f32.gmra.mrb[0].mxu0 %v240
    %v314 = vpop.f32.mrb[0].mxu0
    %v315 = vadd.f32 0.0, %v314
    %v316 = vpop.f32.mrb[0].mxu0
    %317 = vdwg.mxu0
    %vm318 = vcmask 130048
    %319 = vst.msk [vmem:[#allocation8] sm:$0xff] %vm318, %v236
    %320 = vst.msk [vmem:[#allocation8 + $0x8] sm:$0xff] %vm318, %v315
    // Predicated region
    $region26: #{tpu_custom_call.1} parent=1 // pred_check
      _
    $region27: #{tpu_custom_call.1} parent=1 // pred_check_branch
      %322 = sbr.rel (0) target = $region29
    $region28: #{tpu_custom_call.1} parent=1 // pred_region
      %s324 = ssub.s32 256, 256
      %325 = vsyncadd [#allocation4], %s324
      %s326 = sshll.u32 [#allocation8], 4
      %s327 = int_to_ptr.vmem [resolvable:$true] %s326
      %332 = dma.vmem_to_hbm [thread:$0]  %s327, 256, %s3, [#allocation4], 128, 128, 8
    $region29: #{tpu_custom_call.1} parent=1 // pred_fallthru
      _
    // Predicated region
    $region30: #{tpu_custom_call.1} parent=1 // pred_check
      _
    $region31: #{tpu_custom_call.1} parent=1 // pred_check_branch
      %334 = sbr.rel (0) target = $region33
    $region32: #{tpu_custom_call.1} parent=1 // pred_region
      %335 = dma.done [#allocation4], 256
    $region33: #{tpu_custom_call.1} parent=1 // pred_fallthru
      _
    %336 = vsyncpa [#allocation3], 1
    %337 = vsyncpa [#allocation6], 1
    %338 = vsyncpa [#allocation4], 1

</llo_original>
